<compile_context>
chip_gen: v7x
topology: tpu7x:2x2x1
jax: 0.10.0
libtpu: 0.0.40
codegen_flags: <defaults>
</compile_context>

<pallas_src>
import functools

import jax
import jax.numpy as jnp
from jax.experimental import pallas as pl
from jax.experimental.pallas import tpu as pltpu


def _round_up(n, m):
    return ((n + m - 1) // m) * m


def _largest_div128(total, cap):
    """Largest multiple of 128 that divides `total` and is <= cap (min 128)."""
    cap = max(128, min(cap, total))
    best = 128
    c = 128
    while c <= cap:
        if total % c == 0:
            best = c
        c += 128
    return best


def _vmem_budget_bytes():
    """Usable per-core VMEM budget (generation-aware, conservative)."""
    try:
        phys = int(pltpu.get_tpu_info().vmem_capacity_bytes)
    except Exception:
        phys = 64 << 20  # conservative (v7x-sized) fallback
    return max(int(phys * 0.8), 24 << 20)


# ----------------------------------------------------------------------------
# Kernels
# ----------------------------------------------------------------------------
def _ffn_stream_kernel(x_ref, w1_ref, b1_ref, w2_ref, b2_ref, o_ref, acc_ref):
    """Grid = (row tiles, d_ff slabs).  Weights streamed per k-step."""
    k = pl.program_id(1)

    @pl.when(k == 0)
    def _():
        acc_ref[...] = jnp.zeros_like(acc_ref)

    # h_k = relu(x @ W1[:, k-slab] + b1[k-slab])   (dropout == identity, eval)
    h = jnp.dot(x_ref[...], w1_ref[...], preferred_element_type=jnp.float32)
    h = jnp.maximum(h + b1_ref[...].astype(jnp.float32), 0.0)

    # acc += h_k @ W2[k-slab, :]
    acc_ref[...] += jnp.dot(h.astype(w2_ref.dtype), w2_ref[...],
                            preferred_element_type=jnp.float32)

    @pl.when(k == pl.num_programs(1) - 1)
    def _():
        y = acc_ref[...] + b2_ref[...].astype(jnp.float32)
        o_ref[...] = y.astype(o_ref.dtype)


def _ffn_resident_kernel(x_ref, w1_ref, b1_ref, w2_ref, b2_ref, o_ref, acc_ref,
                         *, n_k, tk):
    """Grid = (row tiles,).  Full W1/W2 are VMEM-resident (DMA'd once, constant
    block index); d_ff reduction is an in-kernel loop over static slabs."""
    acc_ref[...] = jnp.zeros_like(acc_ref)
    for kk in range(n_k):
        sl = slice(kk * tk, (kk + 1) * tk)
        h = jnp.dot(x_ref[...], w1_ref[:, sl],
                    preferred_element_type=jnp.float32)
        h = jnp.maximum(h + b1_ref[:, sl].astype(jnp.float32), 0.0)
        acc_ref[...] += jnp.dot(h.astype(w2_ref.dtype), w2_ref[sl, :],
                                preferred_element_type=jnp.float32)
    o_ref[...] = (acc_ref[...] + b2_ref[...].astype(jnp.float32)).astype(o_ref.dtype)


# ----------------------------------------------------------------------------
# Wrapper
# ----------------------------------------------------------------------------
def prepare_ffn_params(w1, b1, w2, b2, compute_dtype=jnp.bfloat16):
    """Pad (to multiples of 128) and cast the FFN weights ONCE, at init time.

    w1: (d_model, d_ff), b1: (d_ff,), w2: (d_ff, d_model), b2: (d_model,).
    Weight matrices are cast to `compute_dtype` (bf16 by default); biases stay
    f32 (they are added on the f32 accumulator).
    """
    d_model, d_ff = w1.shape
    dm_p = _round_up(d_model, 128)
    dff_p = _round_up(d_ff, 128)
    w1_p = jnp.pad(w1.astype(compute_dtype),
                   ((0, dm_p - d_model), (0, dff_p - d_ff)))
    w2_p = jnp.pad(w2.astype(compute_dtype),
                   ((0, dff_p - d_ff), (0, dm_p - d_model)))
    b1_p = jnp.pad(b1.astype(jnp.float32).reshape(1, d_ff),
                   ((0, 0), (0, dff_p - d_ff)))
    b2_p = jnp.pad(b2.astype(jnp.float32).reshape(1, d_model),
                   ((0, 0), (0, dm_p - d_model)))
    return w1_p, b1_p, w2_p, b2_p


def positionwise_feed_forward(x, w1_p, b1_p, w2_p, b2_p, *,
                              tm=512, tk=512, force_stream=False,
                              vmem_budget=None):
    """x: (batch, seq, d_model) -> (batch, seq, d_model).

    w1_p/b1_p/w2_p/b2_p come from prepare_ffn_params (pre-padded, pre-cast).
    """
    batch, seq, d_model = x.shape
    dm_p, dff_p = w1_p.shape
    assert dm_p == _round_up(d_model, 128), "weights not prepared for this d_model"
    rows = batch * seq
    out_dtype = x.dtype
    compute_dtype = w1_p.dtype

    budget = _vmem_budget_bytes() if vmem_budget is None else int(vmem_budget)
    xi = jnp.dtype(compute_dtype).itemsize   # activation / weight itemsize
    wi = xi
    oi = jnp.dtype(out_dtype).itemsize

    # ---- row tiling ----------------------------------------------------------
    rows_128 = _round_up(rows, 128)
    tm = max(128, min(_round_up(tm, 128), rows_128))
    # v7x megacore: give both TensorCores row tiles when there are enough rows.
    if rows_128 >= 256 and rows_128 // tm < 2:
        tm = _round_up(rows_128 // 2, 128)

    # ---- d_ff tiling (tk: multiple of 128 dividing dff_p) --------------------
    tk = _largest_div128(dff_p, tk)

    # ---- VMEM working-set estimates (conservative: x2 buffers everywhere) ----
    def need_resident(tm_, tk_):
        return (2 * tm_ * dm_p * (xi + oi)          # x / out tiles
                + 2 * 2 * dm_p * dff_p * wi         # full W1 + W2
                + 2 * 4 * (dff_p + dm_p)            # biases (f32)
                + tm_ * dm_p * 4                    # f32 accumulator scratch
                + tm_ * tk_ * (4 + wi))             # h slab temporaries

    def need_stream(tm_, tk_):
        return (2 * tm_ * dm_p * (xi + oi)
                + 2 * (dm_p * tk_ + tk_ * dm_p) * wi
                + 2 * 4 * (tk_ + dm_p)
                + tm_ * dm_p * 4
                + tm_ * tk_ * (4 + wi))

    resident = (not force_stream) and need_resident(tm, tk) <= budget
    if not resident:
        # Shrink tk first, then tm, until the streaming working set fits.
        while need_stream(tm, tk) > budget and (tk > 128 or tm > 128):
            if tk > 128:
                tk = _largest_div128(dff_p, tk - 128)
            else:
                tm = max(128, (tm // 2) // 128 * 128)

    rows_p = _round_up(rows, tm)

    # ---- per-call activation pad/cast (weights already prepared) -------------
    x2d = x.reshape(rows, d_model).astype(compute_dtype)
    if rows_p != rows or dm_p != d_model:
        x2d = jnp.pad(x2d, ((0, rows_p - rows), (0, dm_p - d_model)))

    needed = need_resident(tm, tk) if resident else need_stream(tm, tk)
    vmem_limit = int(min(max(needed * 5 // 4 + (1 << 20), 32 << 20), budget))

    cost = pl.CostEstimate(
        flops=4 * rows * d_model * dff_p,
        transcendentals=0,
        bytes_accessed=(x2d.size * xi + w1_p.size * wi + w2_p.size * wi
                        + b1_p.size * 4 + b2_p.size * 4 + rows_p * dm_p * oi),
    )

    if resident:
        n_k = dff_p // tk
        kernel = functools.partial(_ffn_resident_kernel, n_k=n_k, tk=tk)
        grid_spec = pltpu.PrefetchScalarGridSpec(
            num_scalar_prefetch=0,
            grid=(rows_p // tm,),
            in_specs=[
                pl.BlockSpec((tm, dm_p), lambda i: (i, 0)),      # x tile (streamed)
                pl.BlockSpec((dm_p, dff_p), lambda i: (0, 0)),   # W1 (resident)
                pl.BlockSpec((1, dff_p), lambda i: (0, 0)),      # b1 (resident)
                pl.BlockSpec((dff_p, dm_p), lambda i: (0, 0)),   # W2 (resident)
                pl.BlockSpec((1, dm_p), lambda i: (0, 0)),       # b2 (resident)
            ],
            out_specs=pl.BlockSpec((tm, dm_p), lambda i: (i, 0)),
            scratch_shapes=[pltpu.VMEM((tm, dm_p), jnp.float32)],
        )
        dim_sem = ("parallel",)
    else:
        kernel = _ffn_stream_kernel
        grid_spec = pltpu.PrefetchScalarGridSpec(
            num_scalar_prefetch=0,
            grid=(rows_p // tm, dff_p // tk),
            in_specs=[
                pl.BlockSpec((tm, dm_p), lambda i, k: (i, 0)),   # x tile
                pl.BlockSpec((dm_p, tk), lambda i, k: (0, k)),   # W1 slab
                pl.BlockSpec((1, tk), lambda i, k: (0, k)),      # b1 slab
                pl.BlockSpec((tk, dm_p), lambda i, k: (k, 0)),   # W2 slab
                pl.BlockSpec((1, dm_p), lambda i, k: (0, 0)),    # b2
            ],
            out_specs=pl.BlockSpec((tm, dm_p), lambda i, k: (i, 0)),
            scratch_shapes=[pltpu.VMEM((tm, dm_p), jnp.float32)],
        )
        dim_sem = ("parallel", "arbitrary")

    out_p = pl.pallas_call(
        kernel,
        out_shape=jax.ShapeDtypeStruct((rows_p, dm_p), out_dtype),
        grid_spec=grid_spec,
        compiler_params=pltpu.CompilerParams(
            dimension_semantics=dim_sem,
            vmem_limit_bytes=vmem_limit,
        ),
        cost_estimate=cost,
    )(x2d, w1_p, b1_p, w2_p, b2_p)

    out = out_p
    if rows_p != rows or dm_p != d_model:
        out = out[:rows, :d_model]
    return out.reshape(batch, seq, d_model)


def init_params(key, d_model, d_ff, dtype=jnp.float32):
    """Deterministic init mimicking nn.Linear (uniform +/- 1/sqrt(fan_in))."""
    k1, k2, k3, k4 = jax.random.split(key, 4)
    bound1 = 1.0 / jnp.sqrt(d_model)
    bound2 = 1.0 / jnp.sqrt(d_ff)
    # Stored pre-transposed: W1 (d_model, d_ff), W2 (d_ff, d_model).
    w1 = jax.random.uniform(k1, (d_model, d_ff), dtype, -bound1, bound1)
    b1 = jax.random.uniform(k2, (d_ff,), dtype, -bound1, bound1)
    w2 = jax.random.uniform(k3, (d_ff, d_model), dtype, -bound2, bound2)
    b2 = jax.random.uniform(k4, (d_model,), dtype, -bound2, bound2)
    return w1, b1, w2, b2


if __name__ == "__main__":
    key = jax.random.PRNGKey(0)

    def ref_ffn(x, w1, b1, w2, b2, compute_dtype):
        # Pure-JAX reference matching the kernel's compute dtype (eval dropout).
        h = jnp.dot(x.astype(compute_dtype), w1.astype(compute_dtype),
                    preferred_element_type=jnp.float32)
        h = jnp.maximum(h + b1.astype(jnp.float32), 0.0)
        y = jnp.dot(h.astype(compute_dtype), w2.astype(compute_dtype),
                    preferred_element_type=jnp.float32)
        return (y + b2.astype(jnp.float32)).astype(x.dtype)

    # --- case 1: small module shapes, default bf16 MXU path (weights resident)
    batch, seq, d_model, d_ff = 2, 8, 32, 64
    kx, kp = jax.random.split(key)
    x = jax.random.normal(kx, (batch, seq, d_model), jnp.float32)
    w1, b1, w2, b2 = init_params(kp, d_model, d_ff)

    params_bf16 = prepare_ffn_params(w1, b1, w2, b2, compute_dtype=jnp.bfloat16)
    out = jax.block_until_ready(positionwise_feed_forward(x, *params_bf16))
    ref = ref_ffn(x, w1, b1, w2, b2, jnp.bfloat16)
    assert out.shape == (batch, seq, d_model)
    assert jnp.allclose(out, ref, atol=1e-2, rtol=1e-2), float(
        jnp.max(jnp.abs(out - ref)))

    # --- case 2: f32 compute path against f32 reference
    params_f32 = prepare_ffn_params(w1, b1, w2, b2, compute_dtype=jnp.float32)
    out32 = jax.block_until_ready(positionwise_feed_forward(x, *params_f32))
    ref32 = ref_ffn(x, w1, b1, w2, b2, jnp.float32)
    assert jnp.allclose(out32, ref32, atol=1e-4, rtol=1e-4), float(
        jnp.max(jnp.abs(out32 - ref32)))

    # --- case 3: unaligned dims, multiple row tiles / d_ff slabs, both paths
    b3, s3, dm3, dff3 = 3, 130, 96, 320
    kx2, kp2 = jax.random.split(kp)
    x3 = jax.random.normal(kx2, (b3, s3, dm3), jnp.float32)
    w1b, b1b, w2b, b2b = init_params(kp2, dm3, dff3)
    p3 = prepare_ffn_params(w1b, b1b, w2b, b2b, compute_dtype=jnp.float32)
    ref3 = ref_ffn(x3, w1b, b1b, w2b, b2b, jnp.float32)

    # streaming (grid-k) fallback path
    out_s = jax.block_until_ready(
        positionwise_feed_forward(x3, *p3, tm=128, tk=128, force_stream=True))
    assert jnp.allclose(out_s, ref3, atol=1e-4, rtol=1e-4), float(
        jnp.max(jnp.abs(out_s - ref3)))

    # resident path with an in-kernel multi-slab reduction (n_k > 1)
    out_r = jax.block_until_ready(positionwise_feed_forward(x3, *p3, tk=128))
    assert jnp.allclose(out_r, ref3, atol=1e-4, rtol=1e-4), float(
        jnp.max(jnp.abs(out_r - ref3)))

    print("KERNEL_OK")
</pallas_src>

<mosaic_0001>
module attributes {stable_mosaic.version = 11 : i64} {
  func.func @_ffn_resident_kernel(%arg0: i32, %arg1: memref<128x128xbf16, #tpu.memory_space<vmem>>, %arg2: memref<128x128xbf16, #tpu.memory_space<vmem>>, %arg3: memref<1x128xf32, #tpu.memory_space<vmem>>, %arg4: memref<128x128xbf16, #tpu.memory_space<vmem>>, %arg5: memref<1x128xf32, #tpu.memory_space<vmem>>, %arg6: memref<128x128xf32, #tpu.memory_space<vmem>>, %arg7: memref<128x128xf32, #tpu.memory_space<vmem>>) attributes {dimension_semantics = [#tpu.dimension_semantics<parallel>], iteration_bounds = array<i64: 1>, scalar_prefetch = 0 : i64, scratch_operands = 1 : i64, tpu.core_type = #tpu.core_type<tc>, window_params = [{transform_indices = @transform_0, window_bounds = array<i64: 128, 128>}, {pipeline_mode = #tpu.pipeline_mode<synchronous>, transform_indices = @transform_1, window_bounds = array<i64: 128, 128>}, {pipeline_mode = #tpu.pipeline_mode<synchronous>, transform_indices = @transform_2, window_bounds = array<i64: 1, 128>}, {pipeline_mode = #tpu.pipeline_mode<synchronous>, transform_indices = @transform_3, window_bounds = array<i64: 128, 128>}, {pipeline_mode = #tpu.pipeline_mode<synchronous>, transform_indices = @transform_4, window_bounds = array<i64: 1, 128>}, {transform_indices = @transform_5, window_bounds = array<i64: 128, 128>}]} {
    %cst = arith.constant 0.000000e+00 : f32
    %0 = vector.broadcast %cst : f32 to vector<128x128xf32>
    %c0 = arith.constant 0 : index
    %c0_0 = arith.constant 0 : index
    %1 = vector.load %arg7[%c0, %c0_0] : memref<128x128xf32, #tpu.memory_space<vmem>>, vector<128x128xf32>
    tpu.vector_store %arg7[%c0, %c0_0], %0 {strides = array<i32>} : memref<128x128xf32, #tpu.memory_space<vmem>>, vector<128x128xf32>,
    %c0_1 = arith.constant 0 : index
    %c0_2 = arith.constant 0 : index
    %2 = vector.load %arg1[%c0_1, %c0_2] : memref<128x128xbf16, #tpu.memory_space<vmem>>, vector<128x128xbf16>
    %c0_3 = arith.constant 0 : index
    %c0_4 = arith.constant 0 : index
    %3 = vector.load %arg2[%c0_3, %c0_4] : memref<128x128xbf16, #tpu.memory_space<vmem>>, vector<128x128xbf16>
    %cst_5 = arith.constant dense<0.000000e+00> : vector<128x128xf32>
    %4 = tpu.matmul %2, %3, %cst_5 {dimension_numbers = #tpu.dot_dimension_numbers<[1], [0], [0], [1], [0, 0, 1, 1], [], []>} : vector<128x128xbf16>, vector<128x128xbf16>, vector<128x128xf32> -> vector<128x128xf32>
    %c0_6 = arith.constant 0 : index
    %c0_7 = arith.constant 0 : index
    %5 = vector.load %arg3[%c0_6, %c0_7] : memref<1x128xf32, #tpu.memory_space<vmem>>, vector<1x128xf32>
    %6 = vector.broadcast %5 : vector<1x128xf32> to vector<128x128xf32>
    %7 = arith.addf %4, %6 : vector<128x128xf32>
    %cst_8 = arith.constant 0.000000e+00 : f32
    %8 = vector.broadcast %cst_8 : f32 to vector<128x128xf32>
    %9 = arith.maximumf %7, %8 : vector<128x128xf32>
    %c0_9 = arith.constant 0 : index
    %c0_10 = arith.constant 0 : index
    %10 = vector.load %arg7[%c0_9, %c0_10] : memref<128x128xf32, #tpu.memory_space<vmem>>, vector<128x128xf32>
    %11 = arith.truncf %9 : vector<128x128xf32> to vector<128x128xbf16>
    %c0_11 = arith.constant 0 : index
    %c0_12 = arith.constant 0 : index
    %12 = vector.load %arg4[%c0_11, %c0_12] : memref<128x128xbf16, #tpu.memory_space<vmem>>, vector<128x128xbf16>
    %cst_13 = arith.constant dense<0.000000e+00> : vector<128x128xf32>
    %13 = tpu.matmul %11, %12, %cst_13 {dimension_numbers = #tpu.dot_dimension_numbers<[1], [0], [0], [1], [0, 0, 1, 1], [], []>} : vector<128x128xbf16>, vector<128x128xbf16>, vector<128x128xf32> -> vector<128x128xf32>
    %14 = arith.addf %10, %13 : vector<128x128xf32>
    %c0_14 = arith.constant 0 : index
    %c0_15 = arith.constant 0 : index
    %15 = vector.load %arg7[%c0_14, %c0_15] : memref<128x128xf32, #tpu.memory_space<vmem>>, vector<128x128xf32>
    tpu.vector_store %arg7[%c0_14, %c0_15], %14 {strides = array<i32>} : memref<128x128xf32, #tpu.memory_space<vmem>>, vector<128x128xf32>,
    %c0_16 = arith.constant 0 : index
    %c0_17 = arith.constant 0 : index
    %16 = vector.load %arg7[%c0_16, %c0_17] : memref<128x128xf32, #tpu.memory_space<vmem>>, vector<128x128xf32>
    %c0_18 = arith.constant 0 : index
    %c0_19 = arith.constant 0 : index
    %17 = vector.load %arg5[%c0_18, %c0_19] : memref<1x128xf32, #tpu.memory_space<vmem>>, vector<1x128xf32>
    %18 = vector.broadcast %17 : vector<1x128xf32> to vector<128x128xf32>
    %19 = arith.addf %16, %18 : vector<128x128xf32>
    %c0_20 = arith.constant 0 : index
    %c0_21 = arith.constant 0 : index
    %20 = vector.load %arg6[%c0_20, %c0_21] : memref<128x128xf32, #tpu.memory_space<vmem>>, vector<128x128xf32>
    tpu.vector_store %arg6[%c0_20, %c0_21], %19 {strides = array<i32>} : memref<128x128xf32, #tpu.memory_space<vmem>>, vector<128x128xf32>,
    return
  }
  func.func @transform_0(%arg0: i32) -> (i32, i32) {
    %c0_i32 = arith.constant 0 : i32
    %c0_i32_0 = arith.constant 0 : i32
    return %arg0, %c0_i32 : i32, i32
  }
  func.func @transform_1(%arg0: i32) -> (i32, i32) {
    %c0_i32 = arith.constant 0 : i32
    %c0_i32_0 = arith.constant 0 : i32
    %c0_i32_1 = arith.constant 0 : i32
    return %c0_i32, %c0_i32_0 : i32, i32
  }
  func.func @transform_2(%arg0: i32) -> (i32, i32) {
    %c0_i32 = arith.constant 0 : i32
    %c0_i32_0 = arith.constant 0 : i32
    %c0_i32_1 = arith.constant 0 : i32
    return %c0_i32, %c0_i32_0 : i32, i32
  }
  func.func @transform_3(%arg0: i32) -> (i32, i32) {
    %c0_i32 = arith.constant 0 : i32
    %c0_i32_0 = arith.constant 0 : i32
    %c0_i32_1 = arith.constant 0 : i32
    return %c0_i32, %c0_i32_0 : i32, i32
  }
  func.func @transform_4(%arg0: i32) -> (i32, i32) {
    %c0_i32 = arith.constant 0 : i32
    %c0_i32_0 = arith.constant 0 : i32
    %c0_i32_1 = arith.constant 0 : i32
    return %c0_i32, %c0_i32_0 : i32, i32
  }
  func.func @transform_5(%arg0: i32) -> (i32, i32) {
    %c0_i32 = arith.constant 0 : i32
    %c0_i32_0 = arith.constant 0 : i32
    return %arg0, %c0_i32 : i32, i32
  }
}

</mosaic_0001>

<llo_original>
// kernel: tpu_custom_call.1
$region0: #{tpu_custom_call.1}
  #allocation0 [shape = 'u32[]', space=smem, size = 0x4, offset = 0x4, fixed_abs, tag = 'smem constant byte address 0x4 - core index']
  #allocation1 [shape = 'u32[144,128]{1,0:T(1,128)}', space=vmem, size = 0x12000, scoped, tag = 'internal scratch']
  #allocation2 [shape = 'f32[128,128]{1,0:T(8,128)}', space=vmem, size = 0x10000, scoped, tag = 'scratch operand']
  %s0 = inlined_call_operand.hbm [shape: bf16[128,128], index: 0, kind: input, shape index: {}]
  %s1 = inlined_call_operand.hbm [shape: bf16[128,128], index: 1, kind: input, shape index: {}]
  %s2 = inlined_call_operand.vmem [shape: f32[1,128], index: 2, kind: input, shape index: {}]
  %s3 = inlined_call_operand.hbm [shape: bf16[128,128], index: 3, kind: input, shape index: {}]
  %s4 = inlined_call_operand.vmem [shape: f32[1,128], index: 4, kind: input, shape index: {}]
  %s5 = inlined_call_operand.hbm [shape: f32[128,128], index: 5, kind: output, shape index: {}]
  %s6 = sld [smem:[#allocation0]]
  $region42: #{tpu_custom_call.1} parent=0
    _
  %s8 = ssub.s32 1, %s6
  %s9 = scalar_select 0, %s8, %s6
  $region1: #{tpu_custom_call.1} parent=0
    #allocation3 [shape = 'u8[32768]{0}', space=vmem, size = 0x8000, scoped, tag = 'input window, operand 0, single buffered']
    #allocation4 [shape = 's32[1]{0}', space=sflag, size = 0x4, scoped, tag = 'scoped memory for tpu_custom_call.1']
    #allocation5 [shape = 's32[1]{0}', space=sflag, size = 0x4, scoped, tag = 'scoped memory for tpu_custom_call.1']
    #allocation6 [shape = 'u8[32768]{0}', space=vmem, size = 0x8000, scoped, tag = 'input window, operand 1, single buffered']
    #allocation7 [shape = 's32[1]{0}', space=sflag, size = 0x4, scoped, tag = 'scoped memory for tpu_custom_call.1']
    #allocation8 [shape = 'u8[32768]{0}', space=vmem, size = 0x8000, scoped, tag = 'input window, operand 3, single buffered']
    #allocation9 [shape = 'u8[65536]{0}', space=vmem, size = 0x10000, scoped, tag = 'output window, operand 0, single buffered']
    %10 = vsyncpa [#allocation4], 0
    %11 = vsyncpa [#allocation7], 0
    %12 = vsyncpa [#allocation5], 0
    // Predicated region
    $region2: #{tpu_custom_call.1} parent=1 // pred_check
      _
    $region3: #{tpu_custom_call.1} parent=1 // pred_check_branch
      %14 = sbr.rel (0) target = $region5
    $region4: #{tpu_custom_call.1} parent=1 // pred_region
      %s16 = ssub.s32 1024, 1024
      %17 = vsyncadd [#allocation4], %s16
      %s18 = sshll.u32 [#allocation3], 4
      %s19 = int_to_ptr.vmem [resolvable:$true] %s18
      %24 = dma.hbm_to_vmem [thread:$0]  %s0, 1024, %s19, [#allocation4], 64, 64, 4
    $region5: #{tpu_custom_call.1} parent=1 // pred_fallthru
      _
    // Predicated region
    $region6: #{tpu_custom_call.1} parent=1 // pred_check
      _
    $region7: #{tpu_custom_call.1} parent=1 // pred_check_branch
      %26 = sbr.rel (0) target = $region9
    $region8: #{tpu_custom_call.1} parent=1 // pred_region
      %s28 = ssub.s32 1024, 1024
      %29 = vsyncadd [#allocation7], %s28
      %s30 = sshll.u32 [#allocation6], 4
      %s31 = int_to_ptr.vmem [resolvable:$true] %s30
      %36 = dma.hbm_to_vmem [thread:$0]  %s1, 1024, %s31, [#allocation7], 64, 64, 4
    $region9: #{tpu_custom_call.1} parent=1 // pred_fallthru
      _
    // Predicated region
    $region10: #{tpu_custom_call.1} parent=1 // pred_check
      _
    $region11: #{tpu_custom_call.1} parent=1 // pred_check_branch
      %38 = sbr.rel (0) target = $region13
    $region12: #{tpu_custom_call.1} parent=1 // pred_region
      _
    $region13: #{tpu_custom_call.1} parent=1 // pred_fallthru
      _
    // Predicated region
    $region14: #{tpu_custom_call.1} parent=1 // pred_check
      _
    $region15: #{tpu_custom_call.1} parent=1 // pred_check_branch
      %40 = sbr.rel (0) target = $region17
    $region16: #{tpu_custom_call.1} parent=1 // pred_region
      %s42 = ssub.s32 1024, 1024
      %43 = vsyncadd [#allocation7], %s42
      %s44 = sshll.u32 [#allocation8], 4
      %s45 = int_to_ptr.vmem [resolvable:$true] %s44
      %50 = dma.hbm_to_vmem [thread:$0]  %s3, 1024, %s45, [#allocation7], 64, 64, 4
    $region17: #{tpu_custom_call.1} parent=1 // pred_fallthru
      _
    // Predicated region
    $region18: #{tpu_custom_call.1} parent=1 // pred_check
      _
    $region19: #{tpu_custom_call.1} parent=1 // pred_check_branch
      %52 = sbr.rel (0) target = $region21
    $region20: #{tpu_custom_call.1} parent=1 // pred_region
      _
    $region21: #{tpu_custom_call.1} parent=1 // pred_fallthru
      _
    // Predicated region
    $region22: #{tpu_custom_call.1} parent=1 // pred_check
      _
    $region23: #{tpu_custom_call.1} parent=1 // pred_check_branch
      %54 = sbr.rel (0) target = $region25
    $region24: #{tpu_custom_call.1} parent=1 // pred_region
      %55 = dma.done [#allocation4], 1024
    $region25: #{tpu_custom_call.1} parent=1 // pred_fallthru
      _
    // Predicated region
    $region26: #{tpu_custom_call.1} parent=1 // pred_check
      _
    $region27: #{tpu_custom_call.1} parent=1 // pred_check_branch
      %57 = sbr.rel (0) target = $region29
    $region28: #{tpu_custom_call.1} parent=1 // pred_region
      %58 = dma.done [#allocation7], 1024
    $region29: #{tpu_custom_call.1} parent=1 // pred_fallthru
      _
    // Predicated region
    $region30: #{tpu_custom_call.1} parent=1 // pred_check
      _
    $region31: #{tpu_custom_call.1} parent=1 // pred_check_branch
      %60 = sbr.rel (0) target = $region33
    $region32: #{tpu_custom_call.1} parent=1 // pred_region
      %61 = dma.done [#allocation7], 1024
    $region33: #{tpu_custom_call.1} parent=1 // pred_fallthru
      _
    %63 = vst [vmem:[#allocation2] sm:$0xff] 0.0
    %64 = vst [vmem:[#allocation2 + $0x8] sm:$0xff] 0.0
    %65 = vst [vmem:[#allocation2 + $0x10] sm:$0xff] 0.0
    %66 = vst [vmem:[#allocation2 + $0x18] sm:$0xff] 0.0
    %67 = vst [vmem:[#allocation2 + $0x20] sm:$0xff] 0.0
    %68 = vst [vmem:[#allocation2 + $0x28] sm:$0xff] 0.0
    %69 = vst [vmem:[#allocation2 + $0x30] sm:$0xff] 0.0
    %70 = vst [vmem:[#allocation2 + $0x38] sm:$0xff] 0.0
    %71 = vst [vmem:[#allocation2 + $0x40] sm:$0xff] 0.0
    %72 = vst [vmem:[#allocation2 + $0x48] sm:$0xff] 0.0
    %73 = vst [vmem:[#allocation2 + $0x50] sm:$0xff] 0.0
    %74 = vst [vmem:[#allocation2 + $0x58] sm:$0xff] 0.0
    %75 = vst [vmem:[#allocation2 + $0x60] sm:$0xff] 0.0
    %76 = vst [vmem:[#allocation2 + $0x68] sm:$0xff] 0.0
    %77 = vst [vmem:[#allocation2 + $0x70] sm:$0xff] 0.0
    %78 = vst [vmem:[#allocation2 + $0x78] sm:$0xff] 0.0
    %v79 = vld [vmem:[#allocation3] sm:$0xf]
    %v80 = vld [vmem:[#allocation3 + $0x4] sm:$0xf]
    %v81 = vld [vmem:[#allocation3 + $0x8] sm:$0xf]
    %v82 = vld [vmem:[#allocation3 + $0xc] sm:$0xf]
    %v83 = vld [vmem:[#allocation3 + $0x10] sm:$0xf]
    %v84 = vld [vmem:[#allocation3 + $0x14] sm:$0xf]
    %v85 = vld [vmem:[#allocation3 + $0x18] sm:$0xf]
    %v86 = vld [vmem:[#allocation3 + $0x1c] sm:$0xf]
    %v87 = vld [vmem:[#allocation3 + $0x20] sm:$0xf]
    %v88 = vld [vmem:[#allocation3 + $0x24] sm:$0xf]
    %v89 = vld [vmem:[#allocation3 + $0x28] sm:$0xf]
    %v90 = vld [vmem:[#allocation3 + $0x2c] sm:$0xf]
    %v91 = vld [vmem:[#allocation3 + $0x30] sm:$0xf]
    %v92 = vld [vmem:[#allocation3 + $0x34] sm:$0xf]
    %v93 = vld [vmem:[#allocation3 + $0x38] sm:$0xf]
    %v94 = vld [vmem:[#allocation3 + $0x3c] sm:$0xf]
    %v95 = vld [vmem:[#allocation6] sm:$0xf]
    %v96 = vld [vmem:[#allocation6 + $0x4] sm:$0xf]
    %v97 = vld [vmem:[#allocation6 + $0x8] sm:$0xf]
    %v98 = vld [vmem:[#allocation6 + $0xc] sm:$0xf]
    %v99 = vld [vmem:[#allocation6 + $0x10] sm:$0xf]
    %v100 = vld [vmem:[#allocation6 + $0x14] sm:$0xf]
    %v101 = vld [vmem:[#allocation6 + $0x18] sm:$0xf]
    %v102 = vld [vmem:[#allocation6 + $0x1c] sm:$0xf]
    %v103 = vld [vmem:[#allocation6 + $0x20] sm:$0xf]
    %v104 = vld [vmem:[#allocation6 + $0x24] sm:$0xf]
    %v105 = vld [vmem:[#allocation6 + $0x28] sm:$0xf]
    %v106 = vld [vmem:[#allocation6 + $0x2c] sm:$0xf]
    %v107 = vld [vmem:[#allocation6 + $0x30] sm:$0xf]
    %v108 = vld [vmem:[#allocation6 + $0x34] sm:$0xf]
    %v109 = vld [vmem:[#allocation6 + $0x38] sm:$0xf]
    %v110 = vld [vmem:[#allocation6 + $0x3c] sm:$0xf]
    %v111 = vld [vmem:[%s2] sm:$0x1]
    %v113 = vlaneseq
    %v114 = vshrl.u32 %v113, 7
    %v115 = vsub.s32 0, %v114
    %v116 = vrot.slane %v111, %v115
    %v134 = vunpack.c.l.b16 %v79
    %v135 = vunpack.c.l.b16 %v80
    %v136 = vunpack.c.l.b16 %v81
    %v137 = vunpack.c.l.b16 %v82
    %v138 = vunpack.c.l.b16 %v83
    %v139 = vunpack.c.l.b16 %v84
    %v140 = vunpack.c.l.b16 %v85
    %v141 = vunpack.c.l.b16 %v86
    %v142 = vunpack.c.l.b16 %v87
    %v143 = vunpack.c.l.b16 %v88
    %v144 = vunpack.c.l.b16 %v89
    %v145 = vunpack.c.l.b16 %v90
    %v146 = vunpack.c.l.b16 %v91
    %v147 = vunpack.c.l.b16 %v92
    %v148 = vunpack.c.l.b16 %v93
    %v149 = vunpack.c.l.b16 %v94
    %v150 = vpack.c.b16 %v135, %v134
    %v151 = vpack.c.b16 %v137, %v136
    %v152 = vpack.c.b16 %v139, %v138
    %v153 = vpack.c.b16 %v141, %v140
    %v154 = vpack.c.b16 %v143, %v142
    %v155 = vpack.c.b16 %v145, %v144
    %v156 = vpack.c.b16 %v147, %v146
    %v157 = vpack.c.b16 %v149, %v148
    %v182 = vunpack.c.l.b16 %v95
    %v183 = vunpack.c.l.b16 %v96
    %v184 = vunpack.c.l.b16 %v97
    %v185 = vunpack.c.l.b16 %v98
    %v186 = vunpack.c.l.b16 %v99
    %v187 = vunpack.c.l.b16 %v100
    %v188 = vunpack.c.l.b16 %v101
    %v189 = vunpack.c.l.b16 %v102
    %v190 = vunpack.c.l.b16 %v103
    %v191 = vunpack.c.l.b16 %v104
    %v192 = vunpack.c.l.b16 %v105
    %v193 = vunpack.c.l.b16 %v106
    %v194 = vunpack.c.l.b16 %v107
    %v195 = vunpack.c.l.b16 %v108
    %v196 = vunpack.c.l.b16 %v109
    %v197 = vunpack.c.l.b16 %v110
    %v198 = vpack.c.b16 %v183, %v182
    %v199 = vpack.c.b16 %v185, %v184
    %v200 = vpack.c.b16 %v187, %v186
    %v201 = vpack.c.b16 %v189, %v188
    %v202 = vpack.c.b16 %v191, %v190
    %v203 = vpack.c.b16 %v193, %v192
    %v204 = vpack.c.b16 %v195, %v194
    %v205 = vpack.c.b16 %v197, %v196
    %214 = vmatprep.subr.bf16.mxu0 0
    %215 = vmatpush1.bf16.msra.mxu0 %v198
    %216 = vmatprep.subr.bf16.mxu0 0
    %217 = vmatpush1.bf16.msra.mxu0 %v199
    %218 = vmatprep.subr.bf16.mxu0 0
    %219 = vmatpush1.bf16.msra.mxu0 %v200
    %220 = vmatprep.subr.bf16.mxu0 0
    %221 = vmatpush1.bf16.msra.mxu0 %v201
    %222 = vmatprep.subr.bf16.mxu0 0
    %223 = vmatpush1.bf16.msra.mxu0 %v202
    %224 = vmatprep.subr.bf16.mxu0 0
    %225 = vmatpush1.bf16.msra.mxu0 %v203
    %226 = vmatprep.subr.bf16.mxu0 0
    %227 = vmatpush1.bf16.msra.mxu0 %v204
    %228 = vmatprep.subr.bf16.mxu0 0
    %229 = vmatpush1.bf16.msra.mxu0 %v205
    %230 = vmatprep.subr.bf16.mxu0 0
    %231 = vmatpush1.bf16.msra.mxu0 0
    %232 = vmatprep.subr.bf16.mxu0 0
    %233 = vmatpush1.bf16.msra.mxu0 0
    %234 = vmatprep.subr.bf16.mxu0 0
    %235 = vmatpush1.bf16.msra.mxu0 0
    %236 = vmatprep.subr.bf16.mxu0 0
    %237 = vmatpush1.bf16.msra.mxu0 0
    %238 = vmatprep.subr.bf16.mxu0 0
    %239 = vmatpush1.bf16.msra.mxu0 0
    %240 = vmatprep.subr.bf16.mxu0 0
    %241 = vmatpush1.bf16.msra.mxu0 0
    %242 = vmatprep.subr.bf16.mxu0 0
    %243 = vmatpush1.bf16.msra.mxu0 0
    %244 = vmatprep.subr.bf16.mxu0 0
    %245 = vmatpush1.bf16.msra.mxu0 0
    %246 = vmatprep.mubr.bf16.mxu0 0
    %247 = vmatmul.mubr.bf16.gmra.mrb[0].mxu0 %v150
    %v248 = vpop.f32.mrb[0].mxu0
    %v249 = vadd.f32 %v116, %v248
    %v250 = vpop.f32.mrb[0].mxu0
    %v251 = vpop.f32.mrb[0].mxu0
    %v252 = vadd.f32 %v116, %v251
    %v253 = vpop.f32.mrb[0].mxu0
    %254 = vmatprep.mubr.bf16.mxu0 0
    %255 = vmatmul.mubr.bf16.gmra.mrb[0].mxu0 %v151
    %v256 = vpop.f32.mrb[0].mxu0
    %v257 = vadd.f32 %v116, %v256
    %v258 = vpop.f32.mrb[0].mxu0
    %v259 = vpop.f32.mrb[0].mxu0
    %v260 = vadd.f32 %v116, %v259
    %v261 = vpop.f32.mrb[0].mxu0
    %262 = vmatprep.mubr.bf16.mxu0 0
    %263 = vmatmul.mubr.bf16.gmra.mrb[0].mxu0 %v152
    %v264 = vpop.f32.mrb[0].mxu0
    %v265 = vadd.f32 %v116, %v264
    %v266 = vpop.f32.mrb[0].mxu0
    %v267 = vpop.f32.mrb[0].mxu0
    %v268 = vadd.f32 %v116, %v267
    %v269 = vpop.f32.mrb[0].mxu0
    %270 = vmatprep.mubr.bf16.mxu0 0
    %271 = vmatmul.mubr.bf16.gmra.mrb[0].mxu0 %v153
    %v272 = vpop.f32.mrb[0].mxu0
    %v273 = vadd.f32 %v116, %v272
    %v274 = vpop.f32.mrb[0].mxu0
    %v275 = vpop.f32.mrb[0].mxu0
    %v276 = vadd.f32 %v116, %v275
    %v277 = vpop.f32.mrb[0].mxu0
    %278 = vmatprep.mubr.bf16.mxu0 0
    %279 = vmatmul.mubr.bf16.gmra.mrb[0].mxu0 %v154
    %v280 = vpop.f32.mrb[0].mxu0
    %v281 = vadd.f32 %v116, %v280
    %v282 = vpop.f32.mrb[0].mxu0
    %v283 = vpop.f32.mrb[0].mxu0
    %v284 = vadd.f32 %v116, %v283
    %v285 = vpop.f32.mrb[0].mxu0
    %286 = vmatprep.mubr.bf16.mxu0 0
    %287 = vmatmul.mubr.bf16.gmra.mrb[0].mxu0 %v155
    %v288 = vpop.f32.mrb[0].mxu0
    %v289 = vadd.f32 %v116, %v288
    %v290 = vpop.f32.mrb[0].mxu0
    %v291 = vpop.f32.mrb[0].mxu0
    %v292 = vadd.f32 %v116, %v291
    %v293 = vpop.f32.mrb[0].mxu0
    %294 = vmatprep.mubr.bf16.mxu0 0
    %295 = vmatmul.mubr.bf16.gmra.mrb[0].mxu0 %v156
    %v296 = vpop.f32.mrb[0].mxu0
    %v297 = vadd.f32 %v116, %v296
    %v298 = vpop.f32.mrb[0].mxu0
    %v299 = vpop.f32.mrb[0].mxu0
    %v300 = vadd.f32 %v116, %v299
    %v301 = vpop.f32.mrb[0].mxu0
    %302 = vmatprep.mubr.bf16.mxu0 0
    %303 = vmatmul.mubr.bf16.gmra.mrb[0].mxu0 %v157
    %v304 = vpop.f32.mrb[0].mxu0
    %v305 = vadd.f32 %v116, %v304
    %v306 = vpop.f32.mrb[0].mxu0
    %v307 = vpop.f32.mrb[0].mxu0
    %v308 = vadd.f32 %v116, %v307
    %v309 = vpop.f32.mrb[0].mxu0
    %310 = vdwg.mxu0
    %v311 = vmax.f32 %v249, 0.0
    %v312 = vmax.f32 %v252, 0.0
    %v313 = vmax.f32 %v257, 0.0
    %v314 = vmax.f32 %v260, 0.0
    %v315 = vmax.f32 %v265, 0.0
    %v316 = vmax.f32 %v268, 0.0
    %v317 = vmax.f32 %v273, 0.0
    %v318 = vmax.f32 %v276, 0.0
    %v319 = vmax.f32 %v281, 0.0
    %v320 = vmax.f32 %v284, 0.0
    %v321 = vmax.f32 %v289, 0.0
    %v322 = vmax.f32 %v292, 0.0
    %v323 = vmax.f32 %v297, 0.0
    %v324 = vmax.f32 %v300, 0.0
    %v325 = vmax.f32 %v305, 0.0
    %v326 = vmax.f32 %v308, 0.0
    %v327 = vld [vmem:[#allocation2] sm:$0xff]
    %v328 = vld [vmem:[#allocation2 + $0x8] sm:$0xff]
    %v329 = vld [vmem:[#allocation2 + $0x10] sm:$0xff]
    %v330 = vld [vmem:[#allocation2 + $0x18] sm:$0xff]
    %v331 = vld [vmem:[#allocation2 + $0x20] sm:$0xff]
    %v332 = vld [vmem:[#allocation2 + $0x28] sm:$0xff]
    %v333 = vld [vmem:[#allocation2 + $0x30] sm:$0xff]
    %v334 = vld [vmem:[#allocation2 + $0x38] sm:$0xff]
    %v335 = vld [vmem:[#allocation2 + $0x40] sm:$0xff]
    %v336 = vld [vmem:[#allocation2 + $0x48] sm:$0xff]
    %v337 = vld [vmem:[#allocation2 + $0x50] sm:$0xff]
    %v338 = vld [vmem:[#allocation2 + $0x58] sm:$0xff]
    %v339 = vld [vmem:[#allocation2 + $0x60] sm:$0xff]
    %v340 = vld [vmem:[#allocation2 + $0x68] sm:$0xff]
    %v341 = vld [vmem:[#allocation2 + $0x70] sm:$0xff]
    %v342 = vld [vmem:[#allocation2 + $0x78] sm:$0xff]
    %v343 = vpack.c.bf16 %v312, %v311
    %v344 = vpack.c.bf16 %v314, %v313
    %v345 = vpack.c.bf16 %v316, %v315
    %v346 = vpack.c.bf16 %v318, %v317
    %v347 = vpack.c.bf16 %v320, %v319
    %v348 = vpack.c.bf16 %v322, %v321
    %v349 = vpack.c.bf16 %v324, %v323
    %v350 = vpack.c.bf16 %v326, %v325
    %v351 = vld [vmem:[#allocation8] sm:$0xf]
    %v352 = vld [vmem:[#allocation8 + $0x4] sm:$0xf]
    %v353 = vld [vmem:[#allocation8 + $0x8] sm:$0xf]
    %v354 = vld [vmem:[#allocation8 + $0xc] sm:$0xf]
    %v355 = vld [vmem:[#allocation8 + $0x10] sm:$0xf]
    %v356 = vld [vmem:[#allocation8 + $0x14] sm:$0xf]
    %v357 = vld [vmem:[#allocation8 + $0x18] sm:$0xf]
    %v358 = vld [vmem:[#allocation8 + $0x1c] sm:$0xf]
    %v359 = vld [vmem:[#allocation8 + $0x20] sm:$0xf]
    %v360 = vld [vmem:[#allocation8 + $0x24] sm:$0xf]
    %v361 = vld [vmem:[#allocation8 + $0x28] sm:$0xf]
    %v362 = vld [vmem:[#allocation8 + $0x2c] sm:$0xf]
    %v363 = vld [vmem:[#allocation8 + $0x30] sm:$0xf]
    %v364 = vld [vmem:[#allocation8 + $0x34] sm:$0xf]
    %v365 = vld [vmem:[#allocation8 + $0x38] sm:$0xf]
    %v366 = vld [vmem:[#allocation8 + $0x3c] sm:$0xf]
    %v383 = vunpack.c.l.b16 %v351
    %v384 = vunpack.c.l.b16 %v352
    %v385 = vunpack.c.l.b16 %v353
    %v386 = vunpack.c.l.b16 %v354
    %v387 = vunpack.c.l.b16 %v355
    %v388 = vunpack.c.l.b16 %v356
    %v389 = vunpack.c.l.b16 %v357
    %v390 = vunpack.c.l.b16 %v358
    %v391 = vunpack.c.l.b16 %v359
    %v392 = vunpack.c.l.b16 %v360
    %v393 = vunpack.c.l.b16 %v361
    %v394 = vunpack.c.l.b16 %v362
    %v395 = vunpack.c.l.b16 %v363
    %v396 = vunpack.c.l.b16 %v364
    %v397 = vunpack.c.l.b16 %v365
    %v398 = vunpack.c.l.b16 %v366
    %v399 = vpack.c.b16 %v384, %v383
    %v400 = vpack.c.b16 %v386, %v385
    %v401 = vpack.c.b16 %v388, %v387
    %v402 = vpack.c.b16 %v390, %v389
    %v403 = vpack.c.b16 %v392, %v391
    %v404 = vpack.c.b16 %v394, %v393
    %v405 = vpack.c.b16 %v396, %v395
    %v406 = vpack.c.b16 %v398, %v397
    %415 = vmatprep.subr.bf16.mxu0 0
    %416 = vmatpush1.bf16.msra.mxu0 %v399
    %417 = vmatprep.subr.bf16.mxu0 0
    %418 = vmatpush1.bf16.msra.mxu0 %v400
    %419 = vmatprep.subr.bf16.mxu0 0
    %420 = vmatpush1.bf16.msra.mxu0 %v401
    %421 = vmatprep.subr.bf16.mxu0 0
    %422 = vmatpush1.bf16.msra.mxu0 %v402
    %423 = vmatprep.subr.bf16.mxu0 0
    %424 = vmatpush1.bf16.msra.mxu0 %v403
    %425 = vmatprep.subr.bf16.mxu0 0
    %426 = vmatpush1.bf16.msra.mxu0 %v404
    %427 = vmatprep.subr.bf16.mxu0 0
    %428 = vmatpush1.bf16.msra.mxu0 %v405
    %429 = vmatprep.subr.bf16.mxu0 0
    %430 = vmatpush1.bf16.msra.mxu0 %v406
    %431 = vmatprep.subr.bf16.mxu0 0
    %432 = vmatpush1.bf16.msra.mxu0 0
    %433 = vmatprep.subr.bf16.mxu0 0
    %434 = vmatpush1.bf16.msra.mxu0 0
    %435 = vmatprep.subr.bf16.mxu0 0
    %436 = vmatpush1.bf16.msra.mxu0 0
    %437 = vmatprep.subr.bf16.mxu0 0
    %438 = vmatpush1.bf16.msra.mxu0 0
    %439 = vmatprep.subr.bf16.mxu0 0
    %440 = vmatpush1.bf16.msra.mxu0 0
    %441 = vmatprep.subr.bf16.mxu0 0
    %442 = vmatpush1.bf16.msra.mxu0 0
    %443 = vmatprep.subr.bf16.mxu0 0
    %444 = vmatpush1.bf16.msra.mxu0 0
    %445 = vmatprep.subr.bf16.mxu0 0
    %446 = vmatpush1.bf16.msra.mxu0 0
    %447 = vmatprep.mubr.bf16.mxu0 0
    %448 = vmatmul.mubr.bf16.gmra.mrb[0].mxu0 %v343
    %v449 = vpop.f32.mrb[0].mxu0
    %v450 = vadd.f32 0.0, %v449
    %v451 = vpop.f32.mrb[0].mxu0
    %v452 = vpop.f32.mrb[0].mxu0
    %v453 = vadd.f32 0.0, %v452
    %v454 = vpop.f32.mrb[0].mxu0
    %455 = vmatprep.mubr.bf16.mxu0 0
    %456 = vmatmul.mubr.bf16.gmra.mrb[0].mxu0 %v344
    %v457 = vpop.f32.mrb[0].mxu0
    %v458 = vadd.f32 0.0, %v457
    %v459 = vpop.f32.mrb[0].mxu0
    %v460 = vpop.f32.mrb[0].mxu0
    %v461 = vadd.f32 0.0, %v460
    %v462 = vpop.f32.mrb[0].mxu0
    %463 = vmatprep.mubr.bf16.mxu0 0
    %464 = vmatmul.mubr.bf16.gmra.mrb[0].mxu0 %v345
    %v465 = vpop.f32.mrb[0].mxu0
    %v466 = vadd.f32 0.0, %v465
    %v467 = vpop.f32.mrb[0].mxu0
    %v468 = vpop.f32.mrb[0].mxu0
    %v469 = vadd.f32 0.0, %v468
    %v470 = vpop.f32.mrb[0].mxu0
    %471 = vmatprep.mubr.bf16.mxu0 0
    %472 = vmatmul.mubr.bf16.gmra.mrb[0].mxu0 %v346
    %v473 = vpop.f32.mrb[0].mxu0
    %v474 = vadd.f32 0.0, %v473
    %v475 = vpop.f32.mrb[0].mxu0
    %v476 = vpop.f32.mrb[0].mxu0
    %v477 = vadd.f32 0.0, %v476
    %v478 = vpop.f32.mrb[0].mxu0
    %479 = vmatprep.mubr.bf16.mxu0 0
    %480 = vmatmul.mubr.bf16.gmra.mrb[0].mxu0 %v347
    %v481 = vpop.f32.mrb[0].mxu0
    %v482 = vadd.f32 0.0, %v481
    %v483 = vpop.f32.mrb[0].mxu0
    %v484 = vpop.f32.mrb[0].mxu0
    %v485 = vadd.f32 0.0, %v484
    %v486 = vpop.f32.mrb[0].mxu0
    %487 = vmatprep.mubr.bf16.mxu0 0
    %488 = vmatmul.mubr.bf16.gmra.mrb[0].mxu0 %v348
    %v489 = vpop.f32.mrb[0].mxu0
    %v490 = vadd.f32 0.0, %v489
    %v491 = vpop.f32.mrb[0].mxu0
    %v492 = vpop.f32.mrb[0].mxu0
    %v493 = vadd.f32 0.0, %v492
    %v494 = vpop.f32.mrb[0].mxu0
    %495 = vmatprep.mubr.bf16.mxu0 0
    %496 = vmatmul.mubr.bf16.gmra.mrb[0].mxu0 %v349
    %v497 = vpop.f32.mrb[0].mxu0
    %v498 = vadd.f32 0.0, %v497
    %v499 = vpop.f32.mrb[0].mxu0
    %v500 = vpop.f32.mrb[0].mxu0
    %v501 = vadd.f32 0.0, %v500
    %v502 = vpop.f32.mrb[0].mxu0
    %503 = vmatprep.mubr.bf16.mxu0 0
    %504 = vmatmul.mubr.bf16.gmra.mrb[0].mxu0 %v350
    %v505 = vpop.f32.mrb[0].mxu0
    %v506 = vadd.f32 0.0, %v505
    %v507 = vpop.f32.mrb[0].mxu0
    %v508 = vpop.f32.mrb[0].mxu0
    %v509 = vadd.f32 0.0, %v508
    %v510 = vpop.f32.mrb[0].mxu0
    %511 = vdwg.mxu0
    %v512 = vadd.f32 %v327, %v450
    %v513 = vadd.f32 %v328, %v453
    %v514 = vadd.f32 %v329, %v458
    %v515 = vadd.f32 %v330, %v461
    %v516 = vadd.f32 %v331, %v466
    %v517 = vadd.f32 %v332, %v469
    %v518 = vadd.f32 %v333, %v474
    %v519 = vadd.f32 %v334, %v477
    %v520 = vadd.f32 %v335, %v482
    %v521 = vadd.f32 %v336, %v485
    %v522 = vadd.f32 %v337, %v490
    %v523 = vadd.f32 %v338, %v493
    %v524 = vadd.f32 %v339, %v498
    %v525 = vadd.f32 %v340, %v501
    %v526 = vadd.f32 %v341, %v506
    %v527 = vadd.f32 %v342, %v509
    %528 = vst [vmem:[#allocation2] sm:$0xff] %v512
    %529 = vst [vmem:[#allocation2 + $0x8] sm:$0xff] %v513
    %530 = vst [vmem:[#allocation2 + $0x10] sm:$0xff] %v514
    %531 = vst [vmem:[#allocation2 + $0x18] sm:$0xff] %v515
    %532 = vst [vmem:[#allocation2 + $0x20] sm:$0xff] %v516
    %533 = vst [vmem:[#allocation2 + $0x28] sm:$0xff] %v517
    %534 = vst [vmem:[#allocation2 + $0x30] sm:$0xff] %v518
    %535 = vst [vmem:[#allocation2 + $0x38] sm:$0xff] %v519
    %536 = vst [vmem:[#allocation2 + $0x40] sm:$0xff] %v520
    %537 = vst [vmem:[#allocation2 + $0x48] sm:$0xff] %v521
    %538 = vst [vmem:[#allocation2 + $0x50] sm:$0xff] %v522
    %539 = vst [vmem:[#allocation2 + $0x58] sm:$0xff] %v523
    %540 = vst [vmem:[#allocation2 + $0x60] sm:$0xff] %v524
    %541 = vst [vmem:[#allocation2 + $0x68] sm:$0xff] %v525
    %542 = vst [vmem:[#allocation2 + $0x70] sm:$0xff] %v526
    %543 = vst [vmem:[#allocation2 + $0x78] sm:$0xff] %v527
    %v544 = vld [vmem:[#allocation2] sm:$0xff]
    %v545 = vld [vmem:[#allocation2 + $0x8] sm:$0xff]
    %v546 = vld [vmem:[#allocation2 + $0x10] sm:$0xff]
    %v547 = vld [vmem:[#allocation2 + $0x18] sm:$0xff]
    %v548 = vld [vmem:[#allocation2 + $0x20] sm:$0xff]
    %v549 = vld [vmem:[#allocation2 + $0x28] sm:$0xff]
    %v550 = vld [vmem:[#allocation2 + $0x30] sm:$0xff]
    %v551 = vld [vmem:[#allocation2 + $0x38] sm:$0xff]
    %v552 = vld [vmem:[#allocation2 + $0x40] sm:$0xff]
    %v553 = vld [vmem:[#allocation2 + $0x48] sm:$0xff]
    %v554 = vld [vmem:[#allocation2 + $0x50] sm:$0xff]
    %v555 = vld [vmem:[#allocation2 + $0x58] sm:$0xff]
    %v556 = vld [vmem:[#allocation2 + $0x60] sm:$0xff]
    %v557 = vld [vmem:[#allocation2 + $0x68] sm:$0xff]
    %v558 = vld [vmem:[#allocation2 + $0x70] sm:$0xff]
    %v559 = vld [vmem:[#allocation2 + $0x78] sm:$0xff]
    %v560 = vld [vmem:[%s4] sm:$0x1]
    %v562 = vlaneseq
    %v563 = vshrl.u32 %v562, 7
    %v564 = vsub.s32 0, %v563
    %v565 = vrot.slane %v560, %v564
    %v567 = vadd.f32 %v544, %v565
    %v568 = vadd.f32 %v545, %v565
    %v569 = vadd.f32 %v546, %v565
    %v570 = vadd.f32 %v547, %v565
    %v571 = vadd.f32 %v548, %v565
    %v572 = vadd.f32 %v549, %v565
    %v573 = vadd.f32 %v550, %v565
    %v574 = vadd.f32 %v551, %v565
    %v575 = vadd.f32 %v552, %v565
    %v576 = vadd.f32 %v553, %v565
    %v577 = vadd.f32 %v554, %v565
    %v578 = vadd.f32 %v555, %v565
    %v579 = vadd.f32 %v556, %v565
    %v580 = vadd.f32 %v557, %v565
    %v581 = vadd.f32 %v558, %v565
    %v582 = vadd.f32 %v559, %v565
    %583 = vst [vmem:[#allocation9] sm:$0xff] %v567
    %584 = vst [vmem:[#allocation9 + $0x8] sm:$0xff] %v568
    %585 = vst [vmem:[#allocation9 + $0x10] sm:$0xff] %v569
    %586 = vst [vmem:[#allocation9 + $0x18] sm:$0xff] %v570
    %587 = vst [vmem:[#allocation9 + $0x20] sm:$0xff] %v571
    %588 = vst [vmem:[#allocation9 + $0x28] sm:$0xff] %v572
    %589 = vst [vmem:[#allocation9 + $0x30] sm:$0xff] %v573
    %590 = vst [vmem:[#allocation9 + $0x38] sm:$0xff] %v574
    %591 = vst [vmem:[#allocation9 + $0x40] sm:$0xff] %v575
    %592 = vst [vmem:[#allocation9 + $0x48] sm:$0xff] %v576
    %593 = vst [vmem:[#allocation9 + $0x50] sm:$0xff] %v577
    %594 = vst [vmem:[#allocation9 + $0x58] sm:$0xff] %v578
    %595 = vst [vmem:[#allocation9 + $0x60] sm:$0xff] %v579
    %596 = vst [vmem:[#allocation9 + $0x68] sm:$0xff] %v580
    %597 = vst [vmem:[#allocation9 + $0x70] sm:$0xff] %v581
    %598 = vst [vmem:[#allocation9 + $0x78] sm:$0xff] %v582
    // Predicated region
    $region34: #{tpu_custom_call.1} parent=1 // pred_check
      _
    $region35: #{tpu_custom_call.1} parent=1 // pred_check_branch
      %600 = sbr.rel (0) target = $region37
    $region36: #{tpu_custom_call.1} parent=1 // pred_region
      %s602 = ssub.s32 2048, 2048
      %603 = vsyncadd [#allocation5], %s602
      %s604 = sshll.u32 [#allocation9], 4
      %s605 = int_to_ptr.vmem [resolvable:$true] %s604
      %610 = dma.vmem_to_hbm [thread:$0]  %s605, 2048, %s5, [#allocation5], 128, 128, 8
    $region37: #{tpu_custom_call.1} parent=1 // pred_fallthru
      _
    // Predicated region
    $region38: #{tpu_custom_call.1} parent=1 // pred_check
      _
    $region39: #{tpu_custom_call.1} parent=1 // pred_check_branch
      %612 = sbr.rel (0) target = $region41
    $region40: #{tpu_custom_call.1} parent=1 // pred_region
      %613 = dma.done [#allocation5], 2048
    $region41: #{tpu_custom_call.1} parent=1 // pred_fallthru
      _
    %614 = vsyncpa [#allocation4], 1
    %615 = vsyncpa [#allocation7], 1
    %616 = vsyncpa [#allocation5], 1

</llo_original>
